<compile_context>
chip_gen: v6e
topology: v6e:2x2x1
jax: 0.10.0
libtpu: 0.0.40
codegen_flags: <defaults>
</compile_context>

<pallas_src>
import jax
import jax.numpy as jnp
from jax.experimental import pallas as pl
from jax.experimental.pallas import tpu as pltpu

_LANE = 128  # lane-dense last dim (unmasked vst)
_SUB = 8     # native f32 sublane tile


def _awl_kernel(x_ref, o_ref):
    # x_ref: (2, rows, 128) f32 -- row 0 = per-element task weights, row 1 = loss values.
    w = x_ref[0]
    v = x_ref[1]
    w2 = w * w
    # EUP approx reciprocal + one Newton-Raphson step (~f32-exact, 2 VALU FMAs).
    r = pl.reciprocal(w2, approx=True)
    r = r * (2.0 - w2 * r)
    o_ref[...] = 0.5 * v * r + jnp.log(1.0 + w2)


def _awl_pallas(packed):
    """packed: (2, rows, _LANE) f32. Returns (rows, _LANE) f32."""
    _, rows, lane = packed.shape
    return pl.pallas_call(
        _awl_kernel,
        out_shape=jax.ShapeDtypeStruct((rows, lane), jnp.float32),
        in_specs=[pl.BlockSpec(memory_space=pltpu.MemorySpace.VMEM)],
        out_specs=pl.BlockSpec(memory_space=pltpu.MemorySpace.VMEM),
    )(packed)


@jax.jit
def _awl_forward(params, values, task_idx):
    """Single fused dispatch.

    params:   (num_tasks,) f32 task weights.
    values:   (n,) f32 flattened loss values.
    task_idx: (n,) int32 mapping each loss to its task weight (dynamic -> no
              recompile when the mapping changes; recompile only when n changes).
    Returns one (n,) f32 array of weighted losses.
    """
    n = values.shape[0]
    rows = _SUB * pl.cdiv(n, _SUB * _LANE)  # round up to a native (8,128) f32 tile
    pad = rows * _LANE - n
    # Pad weights with 1.0 so padded lanes stay finite (they become log(2), not 0;
    # they are sliced off below and must never be reduced over without masking).
    w = jnp.pad(params.astype(jnp.float32)[task_idx], (0, pad), constant_values=1.0)
    v = jnp.pad(values.astype(jnp.float32), (0, pad))
    packed = jnp.stack([w, v]).reshape(2, rows, _LANE)  # one packed input DMA
    out_tile = _awl_pallas(packed)
    return out_tile.reshape(-1)[:n]


class AutomaticWeightedLoss:
    """JAX/Pallas port of the PyTorch AutomaticWeightedLoss module (forward only)."""

    def __init__(self, num=2, init_weight=None):
        if init_weight is None:
            # deterministic init, same as torch.ones(num)
            self.params = jnp.ones((num,), dtype=jnp.float32)
        else:
            self.params = jnp.asarray(init_weight, dtype=jnp.float32)

    def __call__(self, *losses):
        # Flatten (weight, loss-dict) pairs; order preserved so duplicate-key
        # overwrite semantics match the reference implementation.
        keys, vals, task_idx = [], [], []
        for t, (_, loss_dict) in enumerate(zip(self.params, losses)):
            for k, v in loss_dict.items():
                keys.append(k)
                vals.append(v)
                task_idx.append(t)
        if not keys:
            return {}

        # Pre-stack values / indices before the jit boundary (stable signature).
        values_arr = jnp.stack(
            [jnp.asarray(v, dtype=jnp.float32).reshape(()) for v in vals]
        )
        idx_arr = jnp.asarray(task_idx, dtype=jnp.int32)

        out_flat = _awl_forward(self.params, values_arr, idx_arr)  # one (n,) output

        # Later tasks overwrite earlier ones on duplicate keys (dict insertion order).
        return {k: out_flat[i] for i, k in enumerate(keys)}


if __name__ == "__main__":
    key = jax.random.PRNGKey(0)
    k1, k2 = jax.random.split(key)

    # Two tasks, each contributing a small dict of scalar losses.
    task1_losses = {
        "loss_cls": jax.random.uniform(k1, (), dtype=jnp.float32) * 2.0,
        "loss_box": jax.random.uniform(k2, (), dtype=jnp.float32) * 3.0,
    }
    task2_losses = {
        "loss_seg": jnp.float32(1.5),
    }

    awl = AutomaticWeightedLoss(num=2)
    out = awl(task1_losses, task2_losses)
    out = {k: jax.block_until_ready(v) for k, v in out.items()}

    # Reference check in plain JAX.
    ok = True
    for w, d in zip(awl.params, (task1_losses, task2_losses)):
        for k, v in d.items():
            ref = 0.5 / (w * w) * v + jnp.log(1.0 + w * w)
            if not jnp.allclose(out[k], ref, rtol=1e-6, atol=1e-6):
                ok = False

    if ok:
        print("KERNEL_OK")
    else:
        print("KERNEL_MISMATCH")
</pallas_src>

<mosaic_0001>
module attributes {stable_mosaic.version = 11 : i64} {
  func.func @_awl_kernel(%arg0: memref<2x8x128xf32, #tpu.memory_space<vmem>>, %arg1: memref<8x128xf32, #tpu.memory_space<vmem>>) attributes {dimension_semantics = [], scalar_prefetch = 0 : i64, scratch_operands = 0 : i64, tpu.core_type = #tpu.core_type<tc>} {
    %c0 = arith.constant 0 : index
    %c0_0 = arith.constant 0 : index
    %c0_1 = arith.constant 0 : index
    %0 = vector.load %arg0[%c0, %c0_0, %c0_1] : memref<2x8x128xf32, #tpu.memory_space<vmem>>, vector<1x8x128xf32>
    %1 = vector.shape_cast %0 : vector<1x8x128xf32> to vector<8x128xf32>
    %c1 = arith.constant 1 : index
    %c0_2 = arith.constant 0 : index
    %c0_3 = arith.constant 0 : index
    %2 = vector.load %arg0[%c1, %c0_2, %c0_3] : memref<2x8x128xf32, #tpu.memory_space<vmem>>, vector<1x8x128xf32>
    %3 = vector.shape_cast %2 : vector<1x8x128xf32> to vector<8x128xf32>
    %4 = arith.mulf %1, %1 : vector<8x128xf32>
    %5 = tpu.reciprocal %4 {approx = true} : vector<8x128xf32> -> vector<8x128xf32>
    %6 = arith.mulf %4, %5 : vector<8x128xf32>
    %cst = arith.constant 2.000000e+00 : f32
    %7 = vector.broadcast %cst : f32 to vector<8x128xf32>
    %8 = arith.subf %7, %6 : vector<8x128xf32>
    %9 = arith.mulf %5, %8 : vector<8x128xf32>
    %cst_4 = arith.constant 5.000000e-01 : f32
    %10 = vector.broadcast %cst_4 : f32 to vector<8x128xf32>
    %11 = arith.mulf %10, %3 : vector<8x128xf32>
    %12 = arith.mulf %11, %9 : vector<8x128xf32>
    %cst_5 = arith.constant 1.000000e+00 : f32
    %13 = vector.broadcast %cst_5 : f32 to vector<8x128xf32>
    %14 = arith.addf %13, %4 : vector<8x128xf32>
    %15 = math.log %14 : vector<8x128xf32>
    %16 = arith.addf %12, %15 : vector<8x128xf32>
    %c0_6 = arith.constant 0 : index
    %c0_7 = arith.constant 0 : index
    %17 = vector.load %arg1[%c0_6, %c0_7] : memref<8x128xf32, #tpu.memory_space<vmem>>, vector<8x128xf32>
    tpu.vector_store %arg1[%c0_6, %c0_7], %16 {strides = array<i32>} : memref<8x128xf32, #tpu.memory_space<vmem>>, vector<8x128xf32>,
    return
  }
}

</mosaic_0001>

<llo_original>
// kernel: _awl_forward.1
$region0: #{_awl_forward.1}
  #allocation0 [shape = 'u32[]', space=smem, size = 0x4, offset = 0x4, fixed_abs, tag = 'smem constant byte address 0x4 - core index']
  #allocation1 [shape = 'u32[144,128]{1,0:T(1,128)}', space=vmem, size = 0x12000, scoped, tag = 'internal scratch']
  %s0 = inlined_call_operand.vmem [shape: f32[2,8,128], index: 0, kind: input, shape index: {}]
  %s1 = inlined_call_operand.vmem [shape: f32[8,128], index: 1, kind: output, shape index: {}]
  %s2 = sld [smem:[#allocation0]]
  $region14: #{_awl_forward.1} parent=0
    _
  %s4 = ssub.s32 1, %s2
  %s5 = scalar_select 0, %s4, %s2
  // Predicated region
  $region2: #{_awl_forward.1} parent=0 // pred_check
    _
  $region3: #{_awl_forward.1} parent=0 // pred_check_branch
    %7 = sbr.rel (0) target = $region5
  $region4: #{_awl_forward.1} parent=0 // pred_region
    _
  $region5: #{_awl_forward.1} parent=0 // pred_fallthru
    _
  %v8 = vld [vmem:[%s0] sm:$0xff]
  %s9 = scalar_lea.vmem %s0, 8
  %v10 = vld [vmem:[%s9] sm:$0xff]
  %v11 = vmul.f32 %v8, %v8
  %v12 = vrcp.pop %v11
  %v13 = vmul.f32 %v11, %v12
  %v14 = vsub.f32 2.0, %v13
  %v15 = vmul.f32 %v12, %v14
  %v16 = vmul.f32 %v10, 0.5
  %v17 = vmul.f32 %v16, %v15
  %v18 = vadd.f32 %v11, 1.0
  %v19 = vlog2.pop %v18
  %v20 = vmul.f32 %v19, 0.6931472
  %v21 = vadd.f32 %v17, %v20
  %22 = vst [vmem:[%s1] sm:$0xff] %v21
  // Predicated region
  $region6: #{_awl_forward.1} parent=0 // pred_check
    _
  $region7: #{_awl_forward.1} parent=0 // pred_check_branch
    %24 = sbr.rel (0) target = $region9
  $region8: #{_awl_forward.1} parent=0 // pred_region
    _
  $region9: #{_awl_forward.1} parent=0 // pred_fallthru
    _
  // Predicated region
  $region10: #{_awl_forward.1} parent=0 // pred_check
    _
  $region11: #{_awl_forward.1} parent=0 // pred_check_branch
    %26 = sbr.rel (0) target = $region13
  $region12: #{_awl_forward.1} parent=0 // pred_region
    _
  $region13: #{_awl_forward.1} parent=0 // pred_fallthru
    _

</llo_original>
